<compile_context>
chip_gen: v5e
topology: v5e:2x2
jax: 0.10.0
libtpu: 0.0.40
codegen_flags: <defaults>
</compile_context>

<pallas_src>
import jax
import jax.numpy as jnp
from jax.experimental import pallas as pl
from jax.experimental.pallas import tpu as pltpu

IN_DIM = 28 * 28      # 784  (model feature width)
IN_PAD = 7 * 128      # 896  (lane-dense padded feature width)
HID = 64


def _round_up(x, m):
    return (x + m - 1) // m * m


def odefunc_kernel(x_ref, w1_ref, b1_ref, w2_ref, b2_ref, w3_ref, b3_ref, o_ref):
    # Entire 3-layer MLP fused per batch tile.
    # x / weights are bf16 (halved HBM traffic, bf16 MXU); accumulation, bias add
    # and tanh are f32; output stored f32, lane-dense (tb, 896).
    x = x_ref[...]                                                       # (tb, 896) bf16
    h1 = jnp.tanh(
        jnp.dot(x, w1_ref[...], preferred_element_type=jnp.float32) + b1_ref[...]
    )                                                                    # (tb, 64) f32
    h2 = jnp.tanh(
        jnp.dot(h1.astype(jnp.bfloat16), w2_ref[...],
                preferred_element_type=jnp.float32) + b2_ref[...]
    )                                                                    # (tb, 64) f32
    out = jnp.dot(h2.astype(jnp.bfloat16), w3_ref[...],
                  preferred_element_type=jnp.float32) + b3_ref[...]      # (tb, 896) f32
    o_ref[...] = out.astype(o_ref.dtype)


def odefunc_forward(t, x, params, *, tb=256):
    """Pallas implementation of ODEFunc.forward. `t` is ignored (as in PyTorch).

    params = (w1, b1, w2, b2, w3, b3) with weights stored (in, out) in f32.
    Any batch size is accepted: ragged batches are zero-padded to the tile size.
    """
    del t
    w1, b1, w2, b2, w3, b3 = params
    B, D = x.shape
    assert D == IN_DIM

    # --- batch-tile selection ------------------------------------------------
    # Large default tile (256 rows) to fill the MXU and amortize per-grid-step
    # overhead; shrink for small batches so we don't pad excessively, and keep
    # the grid >= 2 steps when possible so both v7x TensorCores are used.
    tb_eff = min(tb, _round_up(B, 8))
    if _round_up(B, tb_eff) // tb_eff < 2:
        tb_half = _round_up(-(-B // 2), 8)
        tb_eff = max(8, min(tb_eff, tb_half))
    B_pad = _round_up(B, tb_eff)
    grid = (B_pad // tb_eff,)

    # --- operand preparation (bf16 matmul operands, lane-dense 896 padding) ---
    x_p = jnp.pad(x.astype(jnp.bfloat16),
                  ((0, B_pad - B), (0, IN_PAD - IN_DIM)))                # (B_pad, 896)
    w1p = jnp.pad(w1.astype(jnp.bfloat16), ((0, IN_PAD - IN_DIM), (0, 0)))  # (896, 64)
    b1p = b1.astype(jnp.float32)                                         # (1, 64)
    w2p = w2.astype(jnp.bfloat16)                                        # (64, 64)
    b2p = b2.astype(jnp.float32)                                         # (1, 64)
    w3p = jnp.pad(w3.astype(jnp.bfloat16), ((0, 0), (0, IN_PAD - IN_DIM)))  # (64, 896)
    b3p = jnp.pad(b3.astype(jnp.float32), ((0, 0), (0, IN_PAD - IN_DIM)))   # (1, 896)

    # Weights / biases: whole-array blocks, resident in VMEM for every tile
    # (constant index map -> fetched once by the pipeline).
    full = lambda shape: pl.BlockSpec(shape, lambda i: (0, 0))

    out_p = pl.pallas_call(
        odefunc_kernel,
        out_shape=jax.ShapeDtypeStruct((B_pad, IN_PAD), jnp.float32),
        grid_spec=pltpu.PrefetchScalarGridSpec(
            num_scalar_prefetch=0,
            grid=grid,
            in_specs=[
                pl.BlockSpec((tb_eff, IN_PAD), lambda i: (i, 0)),        # x tile
                full(w1p.shape), full(b1p.shape),
                full(w2p.shape), full(b2p.shape),
                full(w3p.shape), full(b3p.shape),
            ],
            out_specs=pl.BlockSpec((tb_eff, IN_PAD), lambda i: (i, 0)),
        ),
        compiler_params=pltpu.CompilerParams(
            dimension_semantics=("parallel",),
            # ~4 MiB actually used at tb=256; explicit limit leaves headroom for
            # larger tb sweeps while staying inside v7x's 64 MiB physical VMEM.
            vmem_limit_bytes=48 * 1024 * 1024,
        ),
    )(x_p, w1p, b1p, w2p, b2p, w3p, b3p)

    # Drop batch / feature padding outside the kernel.
    return out_p[:B, :IN_DIM].astype(x.dtype)


def init_params(key):
    """Deterministic synthetic parameters (shapes match the nn.Linear layers)."""
    k1, k2, k3, k4, k5, k6 = jax.random.split(key, 6)
    # Stored as (in, out); PyTorch stores (out, in) and computes x @ W.T.
    w1 = jax.random.normal(k1, (IN_DIM, HID), jnp.float32) * (1.0 / IN_DIM**0.5)
    b1 = jax.random.normal(k2, (1, HID), jnp.float32) * 0.01
    w2 = jax.random.normal(k3, (HID, HID), jnp.float32) * (1.0 / HID**0.5)
    b2 = jax.random.normal(k4, (1, HID), jnp.float32) * 0.01
    w3 = jax.random.normal(k5, (HID, IN_DIM), jnp.float32) * (1.0 / HID**0.5)
    b3 = jax.random.normal(k6, (1, IN_DIM), jnp.float32) * 0.01
    return (w1, b1, w2, b2, w3, b3)


def odefunc_reference(t, x, params):
    """JAX reference mirroring the kernel's dtype strategy (bf16 operands, f32 acc)."""
    del t
    w1, b1, w2, b2, w3, b3 = params
    bf = jnp.bfloat16
    h1 = jnp.tanh(jnp.dot(x.astype(bf), w1.astype(bf),
                          preferred_element_type=jnp.float32) + b1)
    h2 = jnp.tanh(jnp.dot(h1.astype(bf), w2.astype(bf),
                          preferred_element_type=jnp.float32) + b2)
    return jnp.dot(h2.astype(bf), w3.astype(bf),
                   preferred_element_type=jnp.float32) + b3


if __name__ == "__main__":
    key = jax.random.PRNGKey(0)
    kp, kx = jax.random.split(key)
    params = init_params(kp)

    # Small batch, intentionally NOT a multiple of 8 to exercise the padding path.
    B = 12
    x = jax.random.normal(kx, (B, IN_DIM), jnp.float32)
    t = jnp.float32(0.0)  # unused, mirrors the PyTorch signature

    out = odefunc_forward(t, x, params)
    out = jax.block_until_ready(out)

    ref = odefunc_reference(t, x, params)
    assert out.shape == (B, IN_DIM)
    max_err = float(jnp.max(jnp.abs(out - ref)))
    assert jnp.allclose(out, ref, atol=2e-3, rtol=2e-3), (
        f"mismatch vs JAX reference (max abs err {max_err:.3e})"
    )

    print("KERNEL_OK")
</pallas_src>

<mosaic_0001>
module attributes {stable_mosaic.version = 11 : i64} {
  func.func @odefunc_kernel(%arg0: i32, %arg1: memref<8x896xbf16, #tpu.memory_space<vmem>>, %arg2: memref<896x64xbf16, #tpu.memory_space<vmem>>, %arg3: memref<1x64xf32, #tpu.memory_space<vmem>>, %arg4: memref<64x64xbf16, #tpu.memory_space<vmem>>, %arg5: memref<1x64xf32, #tpu.memory_space<vmem>>, %arg6: memref<64x896xbf16, #tpu.memory_space<vmem>>, %arg7: memref<1x896xf32, #tpu.memory_space<vmem>>, %arg8: memref<8x896xf32, #tpu.memory_space<vmem>>) attributes {dimension_semantics = [#tpu.dimension_semantics<parallel>], iteration_bounds = array<i64: 2>, scalar_prefetch = 0 : i64, scratch_operands = 0 : i64, tpu.core_type = #tpu.core_type<tc>, window_params = [{transform_indices = @transform_0, window_bounds = array<i64: 8, 896>}, {pipeline_mode = #tpu.pipeline_mode<synchronous>, transform_indices = @transform_1, window_bounds = array<i64: 896, 64>}, {pipeline_mode = #tpu.pipeline_mode<synchronous>, transform_indices = @transform_2, window_bounds = array<i64: 1, 64>}, {pipeline_mode = #tpu.pipeline_mode<synchronous>, transform_indices = @transform_3, window_bounds = array<i64: 64, 64>}, {pipeline_mode = #tpu.pipeline_mode<synchronous>, transform_indices = @transform_4, window_bounds = array<i64: 1, 64>}, {pipeline_mode = #tpu.pipeline_mode<synchronous>, transform_indices = @transform_5, window_bounds = array<i64: 64, 896>}, {pipeline_mode = #tpu.pipeline_mode<synchronous>, transform_indices = @transform_6, window_bounds = array<i64: 1, 896>}, {transform_indices = @transform_7, window_bounds = array<i64: 8, 896>}]} {
    %c0 = arith.constant 0 : index
    %c0_0 = arith.constant 0 : index
    %0 = vector.load %arg1[%c0, %c0_0] : memref<8x896xbf16, #tpu.memory_space<vmem>>, vector<8x896xbf16>
    %c0_1 = arith.constant 0 : index
    %c0_2 = arith.constant 0 : index
    %1 = vector.load %arg2[%c0_1, %c0_2] : memref<896x64xbf16, #tpu.memory_space<vmem>>, vector<896x64xbf16>
    %cst = arith.constant dense<0.000000e+00> : vector<8x64xf32>
    %2 = tpu.matmul %0, %1, %cst {dimension_numbers = #tpu.dot_dimension_numbers<[1], [0], [0], [1], [0, 0, 1, 1], [], []>} : vector<8x896xbf16>, vector<896x64xbf16>, vector<8x64xf32> -> vector<8x64xf32>
    %c0_3 = arith.constant 0 : index
    %c0_4 = arith.constant 0 : index
    %3 = vector.load %arg3[%c0_3, %c0_4] : memref<1x64xf32, #tpu.memory_space<vmem>>, vector<1x64xf32>
    %4 = vector.broadcast %3 : vector<1x64xf32> to vector<8x64xf32>
    %5 = arith.addf %2, %4 : vector<8x64xf32>
    %6 = math.tanh %5 : vector<8x64xf32>
    %7 = arith.truncf %6 : vector<8x64xf32> to vector<8x64xbf16>
    %c0_5 = arith.constant 0 : index
    %c0_6 = arith.constant 0 : index
    %8 = vector.load %arg4[%c0_5, %c0_6] : memref<64x64xbf16, #tpu.memory_space<vmem>>, vector<64x64xbf16>
    %cst_7 = arith.constant dense<0.000000e+00> : vector<8x64xf32>
    %9 = tpu.matmul %7, %8, %cst_7 {dimension_numbers = #tpu.dot_dimension_numbers<[1], [0], [0], [1], [0, 0, 1, 1], [], []>} : vector<8x64xbf16>, vector<64x64xbf16>, vector<8x64xf32> -> vector<8x64xf32>
    %c0_8 = arith.constant 0 : index
    %c0_9 = arith.constant 0 : index
    %10 = vector.load %arg5[%c0_8, %c0_9] : memref<1x64xf32, #tpu.memory_space<vmem>>, vector<1x64xf32>
    %11 = vector.broadcast %10 : vector<1x64xf32> to vector<8x64xf32>
    %12 = arith.addf %9, %11 : vector<8x64xf32>
    %13 = math.tanh %12 : vector<8x64xf32>
    %14 = arith.truncf %13 : vector<8x64xf32> to vector<8x64xbf16>
    %c0_10 = arith.constant 0 : index
    %c0_11 = arith.constant 0 : index
    %15 = vector.load %arg6[%c0_10, %c0_11] : memref<64x896xbf16, #tpu.memory_space<vmem>>, vector<64x896xbf16>
    %cst_12 = arith.constant dense<0.000000e+00> : vector<8x896xf32>
    %16 = tpu.matmul %14, %15, %cst_12 {dimension_numbers = #tpu.dot_dimension_numbers<[1], [0], [0], [1], [0, 0, 1, 1], [], []>} : vector<8x64xbf16>, vector<64x896xbf16>, vector<8x896xf32> -> vector<8x896xf32>
    %c0_13 = arith.constant 0 : index
    %c0_14 = arith.constant 0 : index
    %17 = vector.load %arg7[%c0_13, %c0_14] : memref<1x896xf32, #tpu.memory_space<vmem>>, vector<1x896xf32>
    %18 = vector.broadcast %17 : vector<1x896xf32> to vector<8x896xf32>
    %19 = arith.addf %16, %18 : vector<8x896xf32>
    %c0_15 = arith.constant 0 : index
    %c0_16 = arith.constant 0 : index
    %20 = vector.load %arg8[%c0_15, %c0_16] : memref<8x896xf32, #tpu.memory_space<vmem>>, vector<8x896xf32>
    tpu.vector_store %arg8[%c0_15, %c0_16], %19 {strides = array<i32>} : memref<8x896xf32, #tpu.memory_space<vmem>>, vector<8x896xf32>,
    return
  }
  func.func @transform_0(%arg0: i32) -> (i32, i32) {
    %c0_i32 = arith.constant 0 : i32
    %c0_i32_0 = arith.constant 0 : i32
    return %arg0, %c0_i32 : i32, i32
  }
  func.func @transform_1(%arg0: i32) -> (i32, i32) {
    %c0_i32 = arith.constant 0 : i32
    %c0_i32_0 = arith.constant 0 : i32
    %c0_i32_1 = arith.constant 0 : i32
    return %c0_i32, %c0_i32_0 : i32, i32
  }
  func.func @transform_2(%arg0: i32) -> (i32, i32) {
    %c0_i32 = arith.constant 0 : i32
    %c0_i32_0 = arith.constant 0 : i32
    %c0_i32_1 = arith.constant 0 : i32
    return %c0_i32, %c0_i32_0 : i32, i32
  }
  func.func @transform_3(%arg0: i32) -> (i32, i32) {
    %c0_i32 = arith.constant 0 : i32
    %c0_i32_0 = arith.constant 0 : i32
    %c0_i32_1 = arith.constant 0 : i32
    return %c0_i32, %c0_i32_0 : i32, i32
  }
  func.func @transform_4(%arg0: i32) -> (i32, i32) {
    %c0_i32 = arith.constant 0 : i32
    %c0_i32_0 = arith.constant 0 : i32
    %c0_i32_1 = arith.constant 0 : i32
    return %c0_i32, %c0_i32_0 : i32, i32
  }
  func.func @transform_5(%arg0: i32) -> (i32, i32) {
    %c0_i32 = arith.constant 0 : i32
    %c0_i32_0 = arith.constant 0 : i32
    %c0_i32_1 = arith.constant 0 : i32
    return %c0_i32, %c0_i32_0 : i32, i32
  }
  func.func @transform_6(%arg0: i32) -> (i32, i32) {
    %c0_i32 = arith.constant 0 : i32
    %c0_i32_0 = arith.constant 0 : i32
    %c0_i32_1 = arith.constant 0 : i32
    return %c0_i32, %c0_i32_0 : i32, i32
  }
  func.func @transform_7(%arg0: i32) -> (i32, i32) {
    %c0_i32 = arith.constant 0 : i32
    %c0_i32_0 = arith.constant 0 : i32
    return %arg0, %c0_i32 : i32, i32
  }
}

</mosaic_0001>

<llo_original>
// kernel: tpu_custom_call.1
$region0: #{tpu_custom_call.1}
  #allocation0 [shape = 'u32[]', space=smem, size = 0x4, offset = 0x4, fixed_abs, tag = 'smem constant byte address 0x4 - core index']
  #allocation1 [shape = 'u32[72,128]{1,0:T(1,128)}', space=vmem, size = 0x9000, scoped, tag = 'internal scratch']
  %s0 = inlined_call_operand.vmem [shape: bf16[16,896], index: 0, kind: input, shape index: {}]
  %s1 = inlined_call_operand.vmem [shape: bf16[896,64], index: 1, kind: input, shape index: {}]
  %s2 = inlined_call_operand.vmem [shape: f32[1,64], index: 2, kind: input, shape index: {}]
  %s3 = inlined_call_operand.vmem [shape: bf16[64,64], index: 3, kind: input, shape index: {}]
  %s4 = inlined_call_operand.vmem [shape: f32[1,64], index: 4, kind: input, shape index: {}]
  %s5 = inlined_call_operand.vmem [shape: bf16[64,896], index: 5, kind: input, shape index: {}]
  %s6 = inlined_call_operand.vmem [shape: f32[1,896], index: 6, kind: input, shape index: {}]
  %s7 = inlined_call_operand.hbm [shape: f32[16,896], index: 7, kind: output, shape index: {}]
  %s8 = sld [smem:[#allocation0]]
  $region61: #{tpu_custom_call.1} parent=0
    _
  %s10 = ssub.s32 1, %s8
  %s11 = scalar_select 0, %s10, %s8
  $region1: #{tpu_custom_call.1} parent=0
    #allocation2 [shape = 'u8[57344]{0}', space=vmem, size = 0xe000, scoped, tag = 'output window, operand 0']
    #allocation3 [shape = 's32[2]{0}', space=sflag, size = 0x8, scoped, tag = 'scoped memory for tpu_custom_call.1']
    %12 = vsyncpa [#allocation3], 0
    %s13 = scalar_lea.sflag [#allocation3], 1
    %14 = vsyncpa %s13, 0
    loop: start=0, step=1, limit=4
    $region2: #{tpu_custom_call.1} parent=1 // loop_pre_header
      _
    $region3: #{tpu_custom_call.1} parent=1 // loop_header
      %s16 = sphi 0, %s20
      %p17 = scmp.ge.s32.totalorder %s16, 4
      %s26 = sphi 0, %s28
      %s29 = sphi 0, %s26
      %s30 = sphi 0, %s29
      %s46 = sphi 0, %s30
      %s50 = sphi 0, %s50
      %s52 = sphi 0, %s50
      %s53 = sphi 0, %s52
      %s67 = sphi 0, %s53
      %s71 = sphi 0, %s71
      %s73 = sphi 0, %s71
      %s74 = sphi 0, %s73
      %s88 = sphi 0, %s74
      %s92 = sphi 0, %s92
      %s94 = sphi 0, %s92
      %s95 = sphi 0, %s94
      %s109 = sphi 0, %s95
      %s113 = sphi 0, %s113
      %s115 = sphi 0, %s113
      %s116 = sphi 0, %s115
      %s130 = sphi 0, %s116
      %s134 = sphi 0, %s134
      %s136 = sphi 0, %s134
      %s137 = sphi 0, %s136
      %s151 = sphi 0, %s137
      %s155 = sphi 0, %s155
      %s157 = sphi 0, %s155
      %s158 = sphi 0, %s157
      %s172 = sphi 0, %s158
      %s178 = sphi 0, %s180
      %s181 = sphi 0, %s178
      %s182 = sphi 0, %s181
      %s198 = sphi 0, %s182
    $region4: #{tpu_custom_call.1} parent=1 // loop_header_branch
      %19 = sbr.rel (%p17) target = $region8
    $region5: #{tpu_custom_call.1} parent=1 // loop_body
      %s21 = ssub.s32 %s16, 1
      %s22 = ssub.s32 %s16, 2
      %s23 = sadd.s32 %s16, 1
      %s24 = ssub.s32 %s16, %s23
      %p25 = scmp.eq.s32.totalorder %s24, 0
      %s27 = sadd.s32 %s26, 1
      %s28 = scalar_select %p25, %s26, %s27
      %p31 = pneg %p25
      %p32 = scmp.eq.s32.totalorder %s16, 1
      %p33 = por %p31, %p32
      %p34 = scmp.ne.s32.totalorder %s26, %s29
      %p35 = scmp.eq.s32.totalorder %s16, 0
      %p36 = por %p34, %p35
      %p37 = scmp.ne.s32.totalorder %s26, %s29
      %p38 = scmp.eq.s32.totalorder %s21, 1
      %p39 = por %p37, %p38
      %p40 = scmp.ne.s32.totalorder %s29, %s30
      %p41 = scmp.eq.s32.totalorder %s21, 0
      %p42 = por %p40, %p41
      %p43 = scmp.ne.s32.totalorder %s29, %s30
      %p44 = scmp.eq.s32.totalorder %s22, 1
      %p45 = por %p43, %p44
      %p47 = scmp.ne.s32.totalorder %s30, %s46
      %p48 = scmp.eq.s32.totalorder %s22, 0
      %p49 = por %p47, %p48
      %s51 = sadd.s32 %s50, 1
      %p54 = scmp.eq.s32.totalorder %s16, 1
      %p55 = scmp.ne.s32.totalorder %s50, %s52
      %p56 = scmp.eq.s32.totalorder %s16, 0
      %p57 = por %p55, %p56
      %p58 = scmp.ne.s32.totalorder %s50, %s52
      %p59 = scmp.eq.s32.totalorder %s21, 1
      %p60 = por %p58, %p59
      %p61 = scmp.ne.s32.totalorder %s52, %s53
      %p62 = scmp.eq.s32.totalorder %s21, 0
      %p63 = por %p61, %p62
      %p64 = scmp.ne.s32.totalorder %s52, %s53
      %p65 = scmp.eq.s32.totalorder %s22, 1
      %p66 = por %p64, %p65
      %p68 = scmp.ne.s32.totalorder %s53, %s67
      %p69 = scmp.eq.s32.totalorder %s22, 0
      %p70 = por %p68, %p69
      %s72 = sadd.s32 %s71, 1
      %p75 = scmp.eq.s32.totalorder %s16, 1
      %p76 = scmp.ne.s32.totalorder %s71, %s73
      %p77 = scmp.eq.s32.totalorder %s16, 0
      %p78 = por %p76, %p77
      %p79 = scmp.ne.s32.totalorder %s71, %s73
      %p80 = scmp.eq.s32.totalorder %s21, 1
      %p81 = por %p79, %p80
      %p82 = scmp.ne.s32.totalorder %s73, %s74
      %p83 = scmp.eq.s32.totalorder %s21, 0
      %p84 = por %p82, %p83
      %p85 = scmp.ne.s32.totalorder %s73, %s74
      %p86 = scmp.eq.s32.totalorder %s22, 1
      %p87 = por %p85, %p86
      %p89 = scmp.ne.s32.totalorder %s74, %s88
      %p90 = scmp.eq.s32.totalorder %s22, 0
      %p91 = por %p89, %p90
      %s93 = sadd.s32 %s92, 1
      %p96 = scmp.eq.s32.totalorder %s16, 1
      %p97 = scmp.ne.s32.totalorder %s92, %s94
      %p98 = scmp.eq.s32.totalorder %s16, 0
      %p99 = por %p97, %p98
      %p100 = scmp.ne.s32.totalorder %s92, %s94
      %p101 = scmp.eq.s32.totalorder %s21, 1
      %p102 = por %p100, %p101
      %p103 = scmp.ne.s32.totalorder %s94, %s95
      %p104 = scmp.eq.s32.totalorder %s21, 0
      %p105 = por %p103, %p104
      %p106 = scmp.ne.s32.totalorder %s94, %s95
      %p107 = scmp.eq.s32.totalorder %s22, 1
      %p108 = por %p106, %p107
      %p110 = scmp.ne.s32.totalorder %s95, %s109
      %p111 = scmp.eq.s32.totalorder %s22, 0
      %p112 = por %p110, %p111
      %s114 = sadd.s32 %s113, 1
      %p117 = scmp.eq.s32.totalorder %s16, 1
      %p118 = scmp.ne.s32.totalorder %s113, %s115
      %p119 = scmp.eq.s32.totalorder %s16, 0
      %p120 = por %p118, %p119
      %p121 = scmp.ne.s32.totalorder %s113, %s115
      %p122 = scmp.eq.s32.totalorder %s21, 1
      %p123 = por %p121, %p122
      %p124 = scmp.ne.s32.totalorder %s115, %s116
      %p125 = scmp.eq.s32.totalorder %s21, 0
      %p126 = por %p124, %p125
      %p127 = scmp.ne.s32.totalorder %s115, %s116
      %p128 = scmp.eq.s32.totalorder %s22, 1
      %p129 = por %p127, %p128
      %p131 = scmp.ne.s32.totalorder %s116, %s130
      %p132 = scmp.eq.s32.totalorder %s22, 0
      %p133 = por %p131, %p132
      %s135 = sadd.s32 %s134, 1
      %p138 = scmp.eq.s32.totalorder %s16, 1
      %p139 = scmp.ne.s32.totalorder %s134, %s136
      %p140 = scmp.eq.s32.totalorder %s16, 0
      %p141 = por %p139, %p140
      %p142 = scmp.ne.s32.totalorder %s134, %s136
      %p143 = scmp.eq.s32.totalorder %s21, 1
      %p144 = por %p142, %p143
      %p145 = scmp.ne.s32.totalorder %s136, %s137
      %p146 = scmp.eq.s32.totalorder %s21, 0
      %p147 = por %p145, %p146
      %p148 = scmp.ne.s32.totalorder %s136, %s137
      %p149 = scmp.eq.s32.totalorder %s22, 1
      %p150 = por %p148, %p149
      %p152 = scmp.ne.s32.totalorder %s137, %s151
      %p153 = scmp.eq.s32.totalorder %s22, 0
      %p154 = por %p152, %p153
      %s156 = sadd.s32 %s155, 1
      %p159 = scmp.eq.s32.totalorder %s16, 1
      %p160 = scmp.ne.s32.totalorder %s155, %s157
      %p161 = scmp.eq.s32.totalorder %s16, 0
      %p162 = por %p160, %p161
      %p163 = scmp.ne.s32.totalorder %s155, %s157
      %p164 = scmp.eq.s32.totalorder %s21, 1
      %p165 = por %p163, %p164
      %p166 = scmp.ne.s32.totalorder %s157, %s158
      %p167 = scmp.eq.s32.totalorder %s21, 0
      %p168 = por %p166, %p167
      %p169 = scmp.ne.s32.totalorder %s157, %s158
      %p170 = scmp.eq.s32.totalorder %s22, 1
      %p171 = por %p169, %p170
      %p173 = scmp.ne.s32.totalorder %s158, %s172
      %p174 = scmp.eq.s32.totalorder %s22, 0
      %p175 = por %p173, %p174
      %s176 = ssub.s32 %s16, %s23
      %p177 = scmp.eq.s32.totalorder %s176, 0
      %s179 = sadd.s32 %s178, 1
      %s180 = scalar_select %p177, %s178, %s179
      %p183 = pneg %p177
      %p184 = scmp.eq.s32.totalorder %s16, 1
      %p185 = por %p183, %p184
      %p186 = scmp.ne.s32.totalorder %s178, %s181
      %p187 = scmp.eq.s32.totalorder %s16, 0
      %p188 = por %p186, %p187
      %p189 = scmp.ne.s32.totalorder %s178, %s181
      %p190 = scmp.eq.s32.totalorder %s21, 1
      %p191 = por %p189, %p190
      %p192 = scmp.ne.s32.totalorder %s181, %s182
      %p193 = scmp.eq.s32.totalorder %s21, 0
      %p194 = por %p192, %p193
      %p195 = scmp.ne.s32.totalorder %s181, %s182
      %p196 = scmp.eq.s32.totalorder %s22, 1
      %p197 = por %p195, %p196
      %p199 = scmp.ne.s32.totalorder %s182, %s198
      %p200 = scmp.eq.s32.totalorder %s22, 0
      %p201 = por %p199, %p200
      %p202 = scmp.le.s32.totalorder 1, %s16
      %p203 = scmp.lt.s32.totalorder %s16, 3
      %p204 = pnand %p202, %p203
      %p205 = pneg %p204
      // Predicated region
      $region9: #{tpu_custom_call.1} parent=5 // pred_check
        _
      $region10: #{tpu_custom_call.1} parent=5 // pred_check_branch
        %207 = sbr.rel (%p204) target = $region12
      $region11: #{tpu_custom_call.1} parent=5 // pred_region
        %s208 = ssub.s32 %s16, 1
        // Predicated region
        $region13: #{tpu_custom_call.1} parent=11 // pred_check
          %p209 = pneg %p63
        $region14: #{tpu_custom_call.1} parent=11 // pred_check_branch
          %211 = sbr.rel (%p209) target = $region16
        $region15: #{tpu_custom_call.1} parent=11 // pred_region
          _
        $region16: #{tpu_custom_call.1} parent=11 // pred_fallthru
          _
        // Predicated region
        $region17: #{tpu_custom_call.1} parent=11 // pred_check
          %p212 = pneg %p84
        $region18: #{tpu_custom_call.1} parent=11 // pred_check_branch
          %214 = sbr.rel (%p212) target = $region20
        $region19: #{tpu_custom_call.1} parent=11 // pred_region
          _
        $region20: #{tpu_custom_call.1} parent=11 // pred_fallthru
          _
        // Predicated region
        $region21: #{tpu_custom_call.1} parent=11 // pred_check
          %p215 = pneg %p105
        $region22: #{tpu_custom_call.1} parent=11 // pred_check_branch
          %217 = sbr.rel (%p215) target = $region24
        $region23: #{tpu_custom_call.1} parent=11 // pred_region
          _
        $region24: #{tpu_custom_call.1} parent=11 // pred_fallthru
          _
        // Predicated region
        $region25: #{tpu_custom_call.1} parent=11 // pred_check
          %p218 = pneg %p126
        $region26: #{tpu_custom_call.1} parent=11 // pred_check_branch
          %220 = sbr.rel (%p218) target = $region28
        $region27: #{tpu_custom_call.1} parent=11 // pred_region
          _
        $region28: #{tpu_custom_call.1} parent=11 // pred_fallthru
          _
        // Predicated region
        $region29: #{tpu_custom_call.1} parent=11 // pred_check
          %p221 = pneg %p147
        $region30: #{tpu_custom_call.1} parent=11 // pred_check_branch
          %223 = sbr.rel (%p221) target = $region32
        $region31: #{tpu_custom_call.1} parent=11 // pred_region
          _
        $region32: #{tpu_custom_call.1} parent=11 // pred_fallthru
          _
        // Predicated region
        $region33: #{tpu_custom_call.1} parent=11 // pred_check
          %p224 = pneg %p168
        $region34: #{tpu_custom_call.1} parent=11 // pred_check_branch
          %226 = sbr.rel (%p224) target = $region36
        $region35: #{tpu_custom_call.1} parent=11 // pred_region
          _
        $region36: #{tpu_custom_call.1} parent=11 // pred_fallthru
          _
      $region12: #{tpu_custom_call.1} parent=5 // pred_fallthru
        _
      %p227 = scmp.lt.s32.totalorder %s16, 2
      // Predicated region
      $region37: #{tpu_custom_call.1} parent=5 // pred_check
        %p228 = pneg %p227
      $region38: #{tpu_custom_call.1} parent=5 // pred_check_branch
        %230 = sbr.rel (%p228) target = $region40
      $region39: #{tpu_custom_call.1} parent=5 // pred_region
        // Predicated region
        $region41: #{tpu_custom_call.1} parent=39 // pred_check
          %p231 = pneg %p36
        $region42: #{tpu_custom_call.1} parent=39 // pred_check_branch
          %233 = sbr.rel (%p231) target = $region44
        $region43: #{tpu_custom_call.1} parent=39 // pred_region
          %p234 = scmp.lt.s32.totalorder %s16, 1
          %s235 = scalar_select %p234, %s16, 1
          %s236 = smul.addr %s235, 7
          %s237 = smul.addr %s236, 4
          %s238 = scalar_lea.vmem %s0, %s237
        $region44: #{tpu_custom_call.1} parent=39 // pred_fallthru
          _
      $region40: #{tpu_custom_call.1} parent=5 // pred_fallthru
        _
      %p239 = scmp.le.s32.totalorder 1, %s16
      %p240 = scmp.lt.s32.totalorder %s16, 3
      %p241 = pnand %p239, %p240
      %p242 = pneg %p241
      // Predicated region
      $region45: #{tpu_custom_call.1} parent=5 // pred_check
        _
      $region46: #{tpu_custom_call.1} parent=5 // pred_check_branch
        %244 = sbr.rel (%p241) target = $region48
      $region47: #{tpu_custom_call.1} parent=5 // pred_region
        %s245 = ssub.s32 %s16, 1
        %p246 = scmp.lt.s32.totalorder %s21, 1
        %s247 = scalar_select %p246, %s21, 1
        %s248 = smul.addr %s247, 7
        %s249 = smul.addr %s248, 4
        %s250 = scalar_lea.vmem %s0, %s249
        %p251 = pneg %p42
        %p252 = pneg %p39
        %p253 = pneg %p63
        %p254 = pneg %p60
        %p255 = pneg %p84
        %p256 = pneg %p81
        %p257 = pneg %p105
        %p258 = pneg %p102
        %p259 = pneg %p126
        %p260 = pneg %p123
        %p261 = pneg %p147
        %p262 = pneg %p144
        %p263 = pneg %p168
        %p264 = pneg %p165
        %p265 = pneg %p194
        %p266 = pneg %p191
        %s267 = sand.u32 %s181, 1
        %s268 = scalar_lea.sflag [#allocation3], %s267
        %s269 = sand.u32 %s181, 1
        %s270 = smul.addr %s269, 56
        %s271 = scalar_lea.vmem [#allocation2], %s270
        %p272 = scmp.lt.s32.totalorder %s21, 1
        %s273 = scalar_select %p272, %s21, 1
        %s274 = smul.addr %s273, 7
        %s275 = smul.addr %s274, 4
        %s276 = scalar_lea.vmem %s0, %s275
        %v278 = vld [vmem:[%s276] sm:$0xff]
        %v279 = vld [vmem:[%s276 + $0x8] sm:$0xff]
        %v280 = vld [vmem:[%s276 + $0x10] sm:$0xff]
        %v281 = vld [vmem:[%s276 + $0x18] sm:$0xf]
        %v282 = vld [vmem:[%s1] sm:$0xf]
        %v283 = vld [vmem:[%s1 + $0x4] sm:$0xf]
        %v284 = vld [vmem:[%s1 + $0x8] sm:$0xf]
        %v285 = vld [vmem:[%s1 + $0xc] sm:$0xf]
        %v286 = vld [vmem:[%s1 + $0x10] sm:$0xf]
        %v287 = vld [vmem:[%s1 + $0x14] sm:$0xf]
        %v288 = vld [vmem:[%s1 + $0x18] sm:$0xf]
        %v289 = vld [vmem:[%s1 + $0x1c] sm:$0xf]
        %v290 = vld [vmem:[%s1 + $0x20] sm:$0xf]
        %v291 = vld [vmem:[%s1 + $0x24] sm:$0xf]
        %v292 = vld [vmem:[%s1 + $0x28] sm:$0xf]
        %v293 = vld [vmem:[%s1 + $0x2c] sm:$0xf]
        %v294 = vld [vmem:[%s1 + $0x30] sm:$0xf]
        %v295 = vld [vmem:[%s1 + $0x34] sm:$0xf]
        %v296 = vld [vmem:[%s1 + $0x38] sm:$0xf]
        %v297 = vld [vmem:[%s1 + $0x3c] sm:$0xf]
        %v298 = vld [vmem:[%s1 + $0x40] sm:$0xf]
        %v299 = vld [vmem:[%s1 + $0x44] sm:$0xf]
        %v300 = vld [vmem:[%s1 + $0x48] sm:$0xf]
        %v301 = vld [vmem:[%s1 + $0x4c] sm:$0xf]
        %v302 = vld [vmem:[%s1 + $0x50] sm:$0xf]
        %v303 = vld [vmem:[%s1 + $0x54] sm:$0xf]
        %v304 = vld [vmem:[%s1 + $0x58] sm:$0xf]
        %v305 = vld [vmem:[%s1 + $0x5c] sm:$0xf]
        %v306 = vld [vmem:[%s1 + $0x60] sm:$0xf]
        %v307 = vld [vmem:[%s1 + $0x64] sm:$0xf]
        %v308 = vld [vmem:[%s1 + $0x68] sm:$0xf]
        %v309 = vld [vmem:[%s1 + $0x6c] sm:$0xf]
        %v310 = vld [vmem:[%s1 + $0x70] sm:$0xf]
        %v311 = vld [vmem:[%s1 + $0x74] sm:$0xf]
        %v312 = vld [vmem:[%s1 + $0x78] sm:$0xf]
        %v313 = vld [vmem:[%s1 + $0x7c] sm:$0xf]
        %v314 = vld [vmem:[%s1 + $0x80] sm:$0xf]
        %v315 = vld [vmem:[%s1 + $0x84] sm:$0xf]
        %v316 = vld [vmem:[%s1 + $0x88] sm:$0xf]
        %v317 = vld [vmem:[%s1 + $0x8c] sm:$0xf]
        %v318 = vld [vmem:[%s1 + $0x90] sm:$0xf]
        %v319 = vld [vmem:[%s1 + $0x94] sm:$0xf]
        %v320 = vld [vmem:[%s1 + $0x98] sm:$0xf]
        %v321 = vld [vmem:[%s1 + $0x9c] sm:$0xf]
        %v322 = vld [vmem:[%s1 + $0xa0] sm:$0xf]
        %v323 = vld [vmem:[%s1 + $0xa4] sm:$0xf]
        %v324 = vld [vmem:[%s1 + $0xa8] sm:$0xf]
        %v325 = vld [vmem:[%s1 + $0xac] sm:$0xf]
        %v326 = vld [vmem:[%s1 + $0xb0] sm:$0xf]
        %v327 = vld [vmem:[%s1 + $0xb4] sm:$0xf]
        %v328 = vld [vmem:[%s1 + $0xb8] sm:$0xf]
        %v329 = vld [vmem:[%s1 + $0xbc] sm:$0xf]
        %v330 = vld [vmem:[%s1 + $0xc0] sm:$0xf]
        %v331 = vld [vmem:[%s1 + $0xc4] sm:$0xf]
        %v332 = vld [vmem:[%s1 + $0xc8] sm:$0xf]
        %v333 = vld [vmem:[%s1 + $0xcc] sm:$0xf]
        %v334 = vld [vmem:[%s1 + $0xd0] sm:$0xf]
        %v335 = vld [vmem:[%s1 + $0xd4] sm:$0xf]
        %v336 = vld [vmem:[%s1 + $0xd8] sm:$0xf]
        %v337 = vld [vmem:[%s1 + $0xdc] sm:$0xf]
        %v338 = vld [vmem:[%s1 + $0xe0] sm:$0xf]
        %v339 = vld [vmem:[%s1 + $0xe4] sm:$0xf]
        %v340 = vld [vmem:[%s1 + $0xe8] sm:$0xf]
        %v341 = vld [vmem:[%s1 + $0xec] sm:$0xf]
        %v342 = vld [vmem:[%s1 + $0xf0] sm:$0xf]
        %v343 = vld [vmem:[%s1 + $0xf4] sm:$0xf]
        %v344 = vld [vmem:[%s1 + $0xf8] sm:$0xf]
        %v345 = vld [vmem:[%s1 + $0xfc] sm:$0xf]
        %v346 = vld [vmem:[%s1 + $0x100] sm:$0xf]
        %v347 = vld [vmem:[%s1 + $0x104] sm:$0xf]
        %v348 = vld [vmem:[%s1 + $0x108] sm:$0xf]
        %v349 = vld [vmem:[%s1 + $0x10c] sm:$0xf]
        %v350 = vld [vmem:[%s1 + $0x110] sm:$0xf]
        %v351 = vld [vmem:[%s1 + $0x114] sm:$0xf]
        %v352 = vld [vmem:[%s1 + $0x118] sm:$0xf]
        %v353 = vld [vmem:[%s1 + $0x11c] sm:$0xf]
        %v354 = vld [vmem:[%s1 + $0x120] sm:$0xf]
        %v355 = vld [vmem:[%s1 + $0x124] sm:$0xf]
        %v356 = vld [vmem:[%s1 + $0x128] sm:$0xf]
        %v357 = vld [vmem:[%s1 + $0x12c] sm:$0xf]
        %v358 = vld [vmem:[%s1 + $0x130] sm:$0xf]
        %v359 = vld [vmem:[%s1 + $0x134] sm:$0xf]
        %v360 = vld [vmem:[%s1 + $0x138] sm:$0xf]
        %v361 = vld [vmem:[%s1 + $0x13c] sm:$0xf]
        %v362 = vld [vmem:[%s1 + $0x140] sm:$0xf]
        %v363 = vld [vmem:[%s1 + $0x144] sm:$0xf]
        %v364 = vld [vmem:[%s1 + $0x148] sm:$0xf]
        %v365 = vld [vmem:[%s1 + $0x14c] sm:$0xf]
        %v366 = vld [vmem:[%s1 + $0x150] sm:$0xf]
        %v367 = vld [vmem:[%s1 + $0x154] sm:$0xf]
        %v368 = vld [vmem:[%s1 + $0x158] sm:$0xf]
        %v369 = vld [vmem:[%s1 + $0x15c] sm:$0xf]
        %v370 = vld [vmem:[%s1 + $0x160] sm:$0xf]
        %v371 = vld [vmem:[%s1 + $0x164] sm:$0xf]
        %v372 = vld [vmem:[%s1 + $0x168] sm:$0xf]
        %v373 = vld [vmem:[%s1 + $0x16c] sm:$0xf]
        %v374 = vld [vmem:[%s1 + $0x170] sm:$0xf]
        %v375 = vld [vmem:[%s1 + $0x174] sm:$0xf]
        %v376 = vld [vmem:[%s1 + $0x178] sm:$0xf]
        %v377 = vld [vmem:[%s1 + $0x17c] sm:$0xf]
        %v378 = vld [vmem:[%s1 + $0x180] sm:$0xf]
        %v379 = vld [vmem:[%s1 + $0x184] sm:$0xf]
        %v380 = vld [vmem:[%s1 + $0x188] sm:$0xf]
        %v381 = vld [vmem:[%s1 + $0x18c] sm:$0xf]
        %v382 = vld [vmem:[%s1 + $0x190] sm:$0xf]
        %v383 = vld [vmem:[%s1 + $0x194] sm:$0xf]
        %v384 = vld [vmem:[%s1 + $0x198] sm:$0xf]
        %v385 = vld [vmem:[%s1 + $0x19c] sm:$0xf]
        %v386 = vld [vmem:[%s1 + $0x1a0] sm:$0xf]
        %v387 = vld [vmem:[%s1 + $0x1a4] sm:$0xf]
        %v388 = vld [vmem:[%s1 + $0x1a8] sm:$0xf]
        %v389 = vld [vmem:[%s1 + $0x1ac] sm:$0xf]
        %v390 = vld [vmem:[%s1 + $0x1b0] sm:$0xf]
        %v391 = vld [vmem:[%s1 + $0x1b4] sm:$0xf]
        %v392 = vld [vmem:[%s1 + $0x1b8] sm:$0xf]
        %v393 = vld [vmem:[%s1 + $0x1bc] sm:$0xf]
        %v394 = vld [vmem:[%s2] sm:$0x1]
        %v396 = vperm.slane %v394, 0
        %v402 = vunpack.c.l.b16 %v278
        %v403 = vunpack.c.h.b16 %v278
        %v404 = vunpack.c.l.b16 %v279
        %v405 = vunpack.c.h.b16 %v279
        %v406 = vunpack.c.l.b16 %v280
        %v407 = vunpack.c.h.b16 %v280
        %v408 = vunpack.c.l.b16 %v281
        %v409 = vpack.c.b16 %v402, %v402
        %v410 = vpack.c.b16 %v403, %v403
        %v411 = vpack.c.b16 %v404, %v404
        %v412 = vpack.c.b16 %v405, %v405
        %v413 = vpack.c.b16 %v406, %v406
        %v414 = vpack.c.b16 %v407, %v407
        %v415 = vpack.c.b16 %v408, %v408
        %v535 = vunpack.c.l.b16 %v282
        %v536 = vunpack.c.l.b16 %v283
        %v537 = vunpack.c.l.b16 %v284
        %v538 = vunpack.c.l.b16 %v285
        %v539 = vunpack.c.l.b16 %v286
        %v540 = vunpack.c.l.b16 %v287
        %v541 = vunpack.c.l.b16 %v288
        %v542 = vunpack.c.l.b16 %v289
        %v543 = vunpack.c.l.b16 %v290
        %v544 = vunpack.c.l.b16 %v291
        %v545 = vunpack.c.l.b16 %v292
        %v546 = vunpack.c.l.b16 %v293
        %v547 = vunpack.c.l.b16 %v294
        %v548 = vunpack.c.l.b16 %v295
        %v549 = vunpack.c.l.b16 %v296
        %v550 = vunpack.c.l.b16 %v297
        %v551 = vunpack.c.l.b16 %v298
        %v552 = vunpack.c.l.b16 %v299
        %v553 = vunpack.c.l.b16 %v300
        %v554 = vunpack.c.l.b16 %v301
        %v555 = vunpack.c.l.b16 %v302
        %v556 = vunpack.c.l.b16 %v303
        %v557 = vunpack.c.l.b16 %v304
        %v558 = vunpack.c.l.b16 %v305
        %v559 = vunpack.c.l.b16 %v306
        %v560 = vunpack.c.l.b16 %v307
        %v561 = vunpack.c.l.b16 %v308
        %v562 = vunpack.c.l.b16 %v309
        %v563 = vunpack.c.l.b16 %v310
        %v564 = vunpack.c.l.b16 %v311
        %v565 = vunpack.c.l.b16 %v312
        %v566 = vunpack.c.l.b16 %v313
        %v567 = vunpack.c.l.b16 %v314
        %v568 = vunpack.c.l.b16 %v315
        %v569 = vunpack.c.l.b16 %v316
        %v570 = vunpack.c.l.b16 %v317
        %v571 = vunpack.c.l.b16 %v318
        %v572 = vunpack.c.l.b16 %v319
        %v573 = vunpack.c.l.b16 %v320
        %v574 = vunpack.c.l.b16 %v321
        %v575 = vunpack.c.l.b16 %v322
        %v576 = vunpack.c.l.b16 %v323
        %v577 = vunpack.c.l.b16 %v324
        %v578 = vunpack.c.l.b16 %v325
        %v579 = vunpack.c.l.b16 %v326
        %v580 = vunpack.c.l.b16 %v327
        %v581 = vunpack.c.l.b16 %v328
        %v582 = vunpack.c.l.b16 %v329
        %v583 = vunpack.c.l.b16 %v330
        %v584 = vunpack.c.l.b16 %v331
        %v585 = vunpack.c.l.b16 %v332
        %v586 = vunpack.c.l.b16 %v333
        %v587 = vunpack.c.l.b16 %v334
        %v588 = vunpack.c.l.b16 %v335
        %v589 = vunpack.c.l.b16 %v336
        %v590 = vunpack.c.l.b16 %v337
        %v591 = vunpack.c.l.b16 %v338
        %v592 = vunpack.c.l.b16 %v339
        %v593 = vunpack.c.l.b16 %v340
        %v594 = vunpack.c.l.b16 %v341
        %v595 = vunpack.c.l.b16 %v342
        %v596 = vunpack.c.l.b16 %v343
        %v597 = vunpack.c.l.b16 %v344
        %v598 = vunpack.c.l.b16 %v345
        %v599 = vunpack.c.l.b16 %v346
        %v600 = vunpack.c.l.b16 %v347
        %v601 = vunpack.c.l.b16 %v348
        %v602 = vunpack.c.l.b16 %v349
        %v603 = vunpack.c.l.b16 %v350
        %v604 = vunpack.c.l.b16 %v351
        %v605 = vunpack.c.l.b16 %v352
        %v606 = vunpack.c.l.b16 %v353
        %v607 = vunpack.c.l.b16 %v354
        %v608 = vunpack.c.l.b16 %v355
        %v609 = vunpack.c.l.b16 %v356
        %v610 = vunpack.c.l.b16 %v357
        %v611 = vunpack.c.l.b16 %v358
        %v612 = vunpack.c.l.b16 %v359
        %v613 = vunpack.c.l.b16 %v360
        %v614 = vunpack.c.l.b16 %v361
        %v615 = vunpack.c.l.b16 %v362
        %v616 = vunpack.c.l.b16 %v363
        %v617 = vunpack.c.l.b16 %v364
        %v618 = vunpack.c.l.b16 %v365
        %v619 = vunpack.c.l.b16 %v366
        %v620 = vunpack.c.l.b16 %v367
        %v621 = vunpack.c.l.b16 %v368
        %v622 = vunpack.c.l.b16 %v369
        %v623 = vunpack.c.l.b16 %v370
        %v624 = vunpack.c.l.b16 %v371
        %v625 = vunpack.c.l.b16 %v372
        %v626 = vunpack.c.l.b16 %v373
        %v627 = vunpack.c.l.b16 %v374
        %v628 = vunpack.c.l.b16 %v375
        %v629 = vunpack.c.l.b16 %v376
        %v630 = vunpack.c.l.b16 %v377
        %v631 = vunpack.c.l.b16 %v378
        %v632 = vunpack.c.l.b16 %v379
        %v633 = vunpack.c.l.b16 %v380
        %v634 = vunpack.c.l.b16 %v381
        %v635 = vunpack.c.l.b16 %v382
        %v636 = vunpack.c.l.b16 %v383
        %v637 = vunpack.c.l.b16 %v384
        %v638 = vunpack.c.l.b16 %v385
        %v639 = vunpack.c.l.b16 %v386
        %v640 = vunpack.c.l.b16 %v387
        %v641 = vunpack.c.l.b16 %v388
        %v642 = vunpack.c.l.b16 %v389
        %v643 = vunpack.c.l.b16 %v390
        %v644 = vunpack.c.l.b16 %v391
        %v645 = vunpack.c.l.b16 %v392
        %v646 = vunpack.c.l.b16 %v393
        %v647 = vpack.c.b16 %v536, %v535
        %v648 = vpack.c.b16 %v538, %v537
        %v649 = vpack.c.b16 %v540, %v539
        %v650 = vpack.c.b16 %v542, %v541
        %v651 = vpack.c.b16 %v544, %v543
        %v652 = vpack.c.b16 %v546, %v545
        %v653 = vpack.c.b16 %v548, %v547
        %v654 = vpack.c.b16 %v550, %v549
        %v655 = vpack.c.b16 %v552, %v551
        %v656 = vpack.c.b16 %v554, %v553
        %v657 = vpack.c.b16 %v556, %v555
        %v658 = vpack.c.b16 %v558, %v557
        %v659 = vpack.c.b16 %v560, %v559
        %v660 = vpack.c.b16 %v562, %v561
        %v661 = vpack.c.b16 %v564, %v563
        %v662 = vpack.c.b16 %v566, %v565
        %v663 = vpack.c.b16 %v568, %v567
        %v664 = vpack.c.b16 %v570, %v569
        %v665 = vpack.c.b16 %v572, %v571
        %v666 = vpack.c.b16 %v574, %v573
        %v667 = vpack.c.b16 %v576, %v575
        %v668 = vpack.c.b16 %v578, %v577
        %v669 = vpack.c.b16 %v580, %v579
        %v670 = vpack.c.b16 %v582, %v581
        %v671 = vpack.c.b16 %v584, %v583
        %v672 = vpack.c.b16 %v586, %v585
        %v673 = vpack.c.b16 %v588, %v587
        %v674 = vpack.c.b16 %v590, %v589
        %v675 = vpack.c.b16 %v592, %v591
        %v676 = vpack.c.b16 %v594, %v593
        %v677 = vpack.c.b16 %v596, %v595
        %v678 = vpack.c.b16 %v598, %v597
        %v679 = vpack.c.b16 %v600, %v599
        %v680 = vpack.c.b16 %v602, %v601
        %v681 = vpack.c.b16 %v604, %v603
        %v682 = vpack.c.b16 %v606, %v605
        %v683 = vpack.c.b16 %v608, %v607
        %v684 = vpack.c.b16 %v610, %v609
        %v685 = vpack.c.b16 %v612, %v611
        %v686 = vpack.c.b16 %v614, %v613
        %v687 = vpack.c.b16 %v616, %v615
        %v688 = vpack.c.b16 %v618, %v617
        %v689 = vpack.c.b16 %v620, %v619
        %v690 = vpack.c.b16 %v622, %v621
        %v691 = vpack.c.b16 %v624, %v623
        %v692 = vpack.c.b16 %v626, %v625
        %v693 = vpack.c.b16 %v628, %v627
        %v694 = vpack.c.b16 %v630, %v629
        %v695 = vpack.c.b16 %v632, %v631
        %v696 = vpack.c.b16 %v634, %v633
        %v697 = vpack.c.b16 %v636, %v635
        %v698 = vpack.c.b16 %v638, %v637
        %v699 = vpack.c.b16 %v640, %v639
        %v700 = vpack.c.b16 %v642, %v641
        %v701 = vpack.c.b16 %v644, %v643
        %v702 = vpack.c.b16 %v646, %v645
        %759 = vmatpush.bf16.msra.mxu0 %v654
        %760 = vmatpush.bf16.msra.mxu0 %v653
        %761 = vmatpush.bf16.msra.mxu0 %v652
        %762 = vmatpush.bf16.msra.mxu0 %v651
        %763 = vmatpush.bf16.msra.mxu0 %v650
        %764 = vmatpush.bf16.msra.mxu0 %v649
        %765 = vmatpush.bf16.msra.mxu0 %v648
        %766 = vmatpush.bf16.msra.mxu0 %v647
        %767 = vmatmul.bf16.gmra.mxu0 %v409
        %v768 = vpop.f32.mrf.mxu0
        %v769 = vadd.f32 %v396, %v768
        %v770 = vpop.f32.mrf.mxu0
        %771 = vdwg.mxu0
        %772 = vmatpush.bf16.msra.mxu0 %v662
        %773 = vmatpush.bf16.msra.mxu0 %v661
        %774 = vmatpush.bf16.msra.mxu0 %v660
        %775 = vmatpush.bf16.msra.mxu0 %v659
        %776 = vmatpush.bf16.msra.mxu0 %v658
        %777 = vmatpush.bf16.msra.mxu0 %v657
        %778 = vmatpush.bf16.msra.mxu0 %v656
        %779 = vmatpush.bf16.msra.mxu0 %v655
        %780 = vmatmul.bf16.gmra.mxu0 %v410
        %v781 = vpop.f32.mrf.mxu0
        %v782 = vadd.f32 %v769, %v781
        %v783 = vpop.f32.mrf.mxu0
        %784 = vdwg.mxu0
        %785 = vmatpush.bf16.msra.mxu0 %v670
        %786 = vmatpush.bf16.msra.mxu0 %v669
        %787 = vmatpush.bf16.msra.mxu0 %v668
        %788 = vmatpush.bf16.msra.mxu0 %v667
        %789 = vmatpush.bf16.msra.mxu0 %v666
        %790 = vmatpush.bf16.msra.mxu0 %v665
        %791 = vmatpush.bf16.msra.mxu0 %v664
        %792 = vmatpush.bf16.msra.mxu0 %v663
        %793 = vmatmul.bf16.gmra.mxu0 %v411
        %v794 = vpop.f32.mrf.mxu0
        %v795 = vadd.f32 %v782, %v794
        %v796 = vpop.f32.mrf.mxu0
        %797 = vdwg.mxu0
        %798 = vmatpush.bf16.msra.mxu0 %v678
        %799 = vmatpush.bf16.msra.mxu0 %v677
        %800 = vmatpush.bf16.msra.mxu0 %v676
        %801 = vmatpush.bf16.msra.mxu0 %v675
        %802 = vmatpush.bf16.msra.mxu0 %v674
        %803 = vmatpush.bf16.msra.mxu0 %v673
        %804 = vmatpush.bf16.msra.mxu0 %v672
        %805 = vmatpush.bf16.msra.mxu0 %v671
        %806 = vmatmul.bf16.gmra.mxu0 %v412
        %v807 = vpop.f32.mrf.mxu0
        %v808 = vadd.f32 %v795, %v807
        %v809 = vpop.f32.mrf.mxu0
        %810 = vdwg.mxu0
        %811 = vmatpush.bf16.msra.mxu0 %v686
        %812 = vmatpush.bf16.msra.mxu0 %v685
        %813 = vmatpush.bf16.msra.mxu0 %v684
        %814 = vmatpush.bf16.msra.mxu0 %v683
        %815 = vmatpush.bf16.msra.mxu0 %v682
        %816 = vmatpush.bf16.msra.mxu0 %v681
        %817 = vmatpush.bf16.msra.mxu0 %v680
        %818 = vmatpush.bf16.msra.mxu0 %v679
        %819 = vmatmul.bf16.gmra.mxu0 %v413
        %v820 = vpop.f32.mrf.mxu0
        %v821 = vadd.f32 %v808, %v820
        %v822 = vpop.f32.mrf.mxu0
        %823 = vdwg.mxu0
        %824 = vmatpush.bf16.msra.mxu0 %v694
        %825 = vmatpush.bf16.msra.mxu0 %v693
        %826 = vmatpush.bf16.msra.mxu0 %v692
        %827 = vmatpush.bf16.msra.mxu0 %v691
        %828 = vmatpush.bf16.msra.mxu0 %v690
        %829 = vmatpush.bf16.msra.mxu0 %v689
        %830 = vmatpush.bf16.msra.mxu0 %v688
        %831 = vmatpush.bf16.msra.mxu0 %v687
        %832 = vmatmul.bf16.gmra.mxu0 %v414
        %v833 = vpop.f32.mrf.mxu0
        %v834 = vadd.f32 %v821, %v833
        %v835 = vpop.f32.mrf.mxu0
        %836 = vdwg.mxu0
        %837 = vmatpush.bf16.msra.mxu0 %v702
        %838 = vmatpush.bf16.msra.mxu0 %v701
        %839 = vmatpush.bf16.msra.mxu0 %v700
        %840 = vmatpush.bf16.msra.mxu0 %v699
        %841 = vmatpush.bf16.msra.mxu0 %v698
        %842 = vmatpush.bf16.msra.mxu0 %v697
        %843 = vmatpush.bf16.msra.mxu0 %v696
        %844 = vmatpush.bf16.msra.mxu0 %v695
        %845 = vmatmul.bf16.gmra.mxu0 %v415
        %v846 = vpop.f32.mrf.mxu0
        %v847 = vadd.f32 %v834, %v846
        %v848 = vpop.f32.mrf.mxu0
        %849 = vdwg.mxu0
        %v850 = vtanh.pop %v847
        %v851 = vpack.c.bf16 %v850, %v850
        %v852 = vld [vmem:[%s3] sm:$0xf]
        %v853 = vld [vmem:[%s3 + $0x4] sm:$0xf]
        %v854 = vld [vmem:[%s3 + $0x8] sm:$0xf]
        %v855 = vld [vmem:[%s3 + $0xc] sm:$0xf]
        %v856 = vld [vmem:[%s3 + $0x10] sm:$0xf]
        %v857 = vld [vmem:[%s3 + $0x14] sm:$0xf]
        %v858 = vld [vmem:[%s3 + $0x18] sm:$0xf]
        %v859 = vld [vmem:[%s3 + $0x1c] sm:$0xf]
        %v860 = vld [vmem:[%s4] sm:$0x1]
        %v862 = vperm.slane %v860, 0
        %v872 = vunpack.c.l.b16 %v852
        %v873 = vunpack.c.l.b16 %v853
        %v874 = vunpack.c.l.b16 %v854
        %v875 = vunpack.c.l.b16 %v855
        %v876 = vunpack.c.l.b16 %v856
        %v877 = vunpack.c.l.b16 %v857
        %v878 = vunpack.c.l.b16 %v858
        %v879 = vunpack.c.l.b16 %v859
        %v880 = vpack.c.b16 %v873, %v872
        %v881 = vpack.c.b16 %v875, %v874
        %v882 = vpack.c.b16 %v877, %v876
        %v883 = vpack.c.b16 %v879, %v878
        %vm888 = vcmask 523264
        %v890 = vsel %vm888, %v851, 0
        %892 = vmatpush.bf16.msra.mxu0 0
        %893 = vmatpush.bf16.msra.mxu0 0
        %894 = vmatpush.bf16.msra.mxu0 0
        %895 = vmatpush.bf16.msra.mxu0 0
        %896 = vmatpush.bf16.msra.mxu0 %v883
        %897 = vmatpush.bf16.msra.mxu0 %v882
        %898 = vmatpush.bf16.msra.mxu0 %v881
        %899 = vmatpush.bf16.msra.mxu0 %v880
        %900 = vmatmul.bf16.gmra.mxu0 %v890
        %v901 = vpop.f32.mrf.mxu0
        %v902 = vadd.f32 %v862, %v901
        %v903 = vpop.f32.mrf.mxu0
        %904 = vdwg.mxu0
        %v905 = vtanh.pop %v902
        %v906 = vpack.c.bf16 %v905, %v905
        %v907 = vld [vmem:[%s5] sm:$0xff]
        %v908 = vld [vmem:[%s5 + $0x8] sm:$0xff]
        %v909 = vld [vmem:[%s5 + $0x10] sm:$0xff]
        %v910 = vld [vmem:[%s5 + $0x18] sm:$0xf]
        %v911 = vld [vmem:[%s5 + $0x1c] sm:$0xff]
        %v912 = vld [vmem:[%s5 + $0x24] sm:$0xff]
        %v913 = vld [vmem:[%s5 + $0x2c] sm:$0xff]
        %v914 = vld [vmem:[%s5 + $0x34] sm:$0xf]
        %v915 = vld [vmem:[%s5 + $0x38] sm:$0xff]
        %v916 = vld [vmem:[%s5 + $0x40] sm:$0xff]
        %v917 = vld [vmem:[%s5 + $0x48] sm:$0xff]
        %v918 = vld [vmem:[%s5 + $0x50] sm:$0xf]
        %v919 = vld [vmem:[%s5 + $0x54] sm:$0xff]
        %v920 = vld [vmem:[%s5 + $0x5c] sm:$0xff]
        %v921 = vld [vmem:[%s5 + $0x64] sm:$0xff]
        %v922 = vld [vmem:[%s5 + $0x6c] sm:$0xf]
        %v923 = vld [vmem:[%s5 + $0x70] sm:$0xff]
        %v924 = vld [vmem:[%s5 + $0x78] sm:$0xff]
        %v925 = vld [vmem:[%s5 + $0x80] sm:$0xff]
        %v926 = vld [vmem:[%s5 + $0x88] sm:$0xf]
        %v927 = vld [vmem:[%s5 + $0x8c] sm:$0xff]
        %v928 = vld [vmem:[%s5 + $0x94] sm:$0xff]
        %v929 = vld [vmem:[%s5 + $0x9c] sm:$0xff]
        %v930 = vld [vmem:[%s5 + $0xa4] sm:$0xf]
        %v931 = vld [vmem:[%s5 + $0xa8] sm:$0xff]
        %v932 = vld [vmem:[%s5 + $0xb0] sm:$0xff]
        %v933 = vld [vmem:[%s5 + $0xb8] sm:$0xff]
        %v934 = vld [vmem:[%s5 + $0xc0] sm:$0xf]
        %v935 = vld [vmem:[%s5 + $0xc4] sm:$0xff]
        %v936 = vld [vmem:[%s5 + $0xcc] sm:$0xff]
        %v937 = vld [vmem:[%s5 + $0xd4] sm:$0xff]
        %v938 = vld [vmem:[%s5 + $0xdc] sm:$0xf]
        %v939 = vld [vmem:[%s6] sm:$0xff]
        %v941 = vperm.slane %v939, 0
        %v942 = vperm.slane %v939, 1
        %v943 = vperm.slane %v939, 2
        %v944 = vperm.slane %v939, 3
        %v945 = vperm.slane %v939, 4
        %v946 = vperm.slane %v939, 5
        %v947 = vperm.slane %v939, 6
        %v987 = vunpack.c.l.b16 %v907
        %v988 = vunpack.c.h.b16 %v907
        %v989 = vunpack.c.l.b16 %v908
        %v990 = vunpack.c.h.b16 %v908
        %v991 = vunpack.c.l.b16 %v909
        %v992 = vunpack.c.h.b16 %v909
        %v993 = vunpack.c.l.b16 %v910
        %v994 = vunpack.c.l.b16 %v911
        %v995 = vunpack.c.h.b16 %v911
        %v996 = vunpack.c.l.b16 %v912
        %v997 = vunpack.c.h.b16 %v912
        %v998 = vunpack.c.l.b16 %v913
        %v999 = vunpack.c.h.b16 %v913
        %v1000 = vunpack.c.l.b16 %v914
        %v1001 = vunpack.c.l.b16 %v915
        %v1002 = vunpack.c.h.b16 %v915
        %v1003 = vunpack.c.l.b16 %v916
        %v1004 = vunpack.c.h.b16 %v916
        %v1005 = vunpack.c.l.b16 %v917
        %v1006 = vunpack.c.h.b16 %v917
        %v1007 = vunpack.c.l.b16 %v918
        %v1008 = vunpack.c.l.b16 %v919
        %v1009 = vunpack.c.h.b16 %v919
        %v1010 = vunpack.c.l.b16 %v920
        %v1011 = vunpack.c.h.b16 %v920
        %v1012 = vunpack.c.l.b16 %v921
        %v1013 = vunpack.c.h.b16 %v921
        %v1014 = vunpack.c.l.b16 %v922
        %v1015 = vunpack.c.l.b16 %v923
        %v1016 = vunpack.c.h.b16 %v923
        %v1017 = vunpack.c.l.b16 %v924
        %v1018 = vunpack.c.h.b16 %v924
        %v1019 = vunpack.c.l.b16 %v925
        %v1020 = vunpack.c.h.b16 %v925
        %v1021 = vunpack.c.l.b16 %v926
        %v1022 = vunpack.c.l.b16 %v927
        %v1023 = vunpack.c.h.b16 %v927
        %v1024 = vunpack.c.l.b16 %v928
        %v1025 = vunpack.c.h.b16 %v928
        %v1026 = vunpack.c.l.b16 %v929
        %v1027 = vunpack.c.h.b16 %v929
        %v1028 = vunpack.c.l.b16 %v930
        %v1029 = vunpack.c.l.b16 %v931
        %v1030 = vunpack.c.h.b16 %v931
        %v1031 = vunpack.c.l.b16 %v932
        %v1032 = vunpack.c.h.b16 %v932
        %v1033 = vunpack.c.l.b16 %v933
        %v1034 = vunpack.c.h.b16 %v933
        %v1035 = vunpack.c.l.b16 %v934
        %v1036 = vunpack.c.l.b16 %v935
        %v1037 = vunpack.c.h.b16 %v935
        %v1038 = vunpack.c.l.b16 %v936
        %v1039 = vunpack.c.h.b16 %v936
        %v1040 = vunpack.c.l.b16 %v937
        %v1041 = vunpack.c.h.b16 %v937
        %v1042 = vunpack.c.l.b16 %v938
        %v1043 = vpack.c.b16 %v994, %v987
        %v1044 = vpack.c.b16 %v995, %v988
        %v1045 = vpack.c.b16 %v996, %v989
        %v1046 = vpack.c.b16 %v997, %v990
        %v1047 = vpack.c.b16 %v998, %v991
        %v1048 = vpack.c.b16 %v999, %v992
        %v1049 = vpack.c.b16 %v1000, %v993
        %v1050 = vpack.c.b16 %v1008, %v1001
        %v1051 = vpack.c.b16 %v1009, %v1002
        %v1052 = vpack.c.b16 %v1010, %v1003
        %v1053 = vpack.c.b16 %v1011, %v1004
        %v1054 = vpack.c.b16 %v1012, %v1005
        %v1055 = vpack.c.b16 %v1013, %v1006
        %v1056 = vpack.c.b16 %v1014, %v1007
        %v1057 = vpack.c.b16 %v1022, %v1015
        %v1058 = vpack.c.b16 %v1023, %v1016
        %v1059 = vpack.c.b16 %v1024, %v1017
        %v1060 = vpack.c.b16 %v1025, %v1018
        %v1061 = vpack.c.b16 %v1026, %v1019
        %v1062 = vpack.c.b16 %v1027, %v1020
        %v1063 = vpack.c.b16 %v1028, %v1021
        %v1064 = vpack.c.b16 %v1036, %v1029
        %v1065 = vpack.c.b16 %v1037, %v1030
        %v1066 = vpack.c.b16 %v1038, %v1031
        %v1067 = vpack.c.b16 %v1039, %v1032
        %v1068 = vpack.c.b16 %v1040, %v1033
        %v1069 = vpack.c.b16 %v1041, %v1034
        %v1070 = vpack.c.b16 %v1042, %v1035
        %v1100 = vsel %vm888, %v906, 0
        %1102 = vmatpush.bf16.msra.mxu0 0
        %1103 = vmatpush.bf16.msra.mxu0 0
        %1104 = vmatpush.bf16.msra.mxu0 0
        %1105 = vmatpush.bf16.msra.mxu0 0
        %1106 = vmatpush.bf16.msra.mxu0 %v1064
        %1107 = vmatpush.bf16.msra.mxu0 %v1057
        %1108 = vmatpush.bf16.msra.mxu0 %v1050
        %1109 = vmatpush.bf16.msra.mxu0 %v1043
        %1110 = vmatmul.bf16.gmra.mxu0 %v1100
        %v1111 = vpop.f32.mrf.mxu0
        %v1112 = vadd.f32 %v941, %v1111
        %v1113 = vpop.f32.mrf.mxu0
        %1114 = vdwg.mxu0
        %1115 = vmatpush.bf16.msra.mxu0 0
        %1116 = vmatpush.bf16.msra.mxu0 0
        %1117 = vmatpush.bf16.msra.mxu0 0
        %1118 = vmatpush.bf16.msra.mxu0 0
        %1119 = vmatpush.bf16.msra.mxu0 %v1065
        %1120 = vmatpush.bf16.msra.mxu0 %v1058
        %1121 = vmatpush.bf16.msra.mxu0 %v1051
        %1122 = vmatpush.bf16.msra.mxu0 %v1044
        %1123 = vmatmul.bf16.gmra.mxu0 %v1100
        %v1124 = vpop.f32.mrf.mxu0
        %v1125 = vadd.f32 %v942, %v1124
        %v1126 = vpop.f32.mrf.mxu0
        %1127 = vdwg.mxu0
        %1128 = vmatpush.bf16.msra.mxu0 0
        %1129 = vmatpush.bf16.msra.mxu0 0
        %1130 = vmatpush.bf16.msra.mxu0 0
        %1131 = vmatpush.bf16.msra.mxu0 0
        %1132 = vmatpush.bf16.msra.mxu0 %v1066
        %1133 = vmatpush.bf16.msra.mxu0 %v1059
        %1134 = vmatpush.bf16.msra.mxu0 %v1052
        %1135 = vmatpush.bf16.msra.mxu0 %v1045
        %1136 = vmatmul.bf16.gmra.mxu0 %v1100
        %v1137 = vpop.f32.mrf.mxu0
        %v1138 = vadd.f32 %v943, %v1137
        %v1139 = vpop.f32.mrf.mxu0
        %1140 = vdwg.mxu0
        %1141 = vmatpush.bf16.msra.mxu0 0
        %1142 = vmatpush.bf16.msra.mxu0 0
        %1143 = vmatpush.bf16.msra.mxu0 0
        %1144 = vmatpush.bf16.msra.mxu0 0
        %1145 = vmatpush.bf16.msra.mxu0 %v1067
        %1146 = vmatpush.bf16.msra.mxu0 %v1060
        %1147 = vmatpush.bf16.msra.mxu0 %v1053
        %1148 = vmatpush.bf16.msra.mxu0 %v1046
        %1149 = vmatmul.bf16.gmra.mxu0 %v1100
        %v1150 = vpop.f32.mrf.mxu0
        %v1151 = vadd.f32 %v944, %v1150
        %v1152 = vpop.f32.mrf.mxu0
        %1153 = vdwg.mxu0
        %1154 = vmatpush.bf16.msra.mxu0 0
        %1155 = vmatpush.bf16.msra.mxu0 0
        %1156 = vmatpush.bf16.msra.mxu0 0
        %1157 = vmatpush.bf16.msra.mxu0 0
        %1158 = vmatpush.bf16.msra.mxu0 %v1068
        %1159 = vmatpush.bf16.msra.mxu0 %v1061
        %1160 = vmatpush.bf16.msra.mxu0 %v1054
        %1161 = vmatpush.bf16.msra.mxu0 %v1047
        %1162 = vmatmul.bf16.gmra.mxu0 %v1100
        %v1163 = vpop.f32.mrf.mxu0
        %v1164 = vadd.f32 %v945, %v1163
        %v1165 = vpop.f32.mrf.mxu0
        %1166 = vdwg.mxu0
        %1167 = vmatpush.bf16.msra.mxu0 0
        %1168 = vmatpush.bf16.msra.mxu0 0
        %1169 = vmatpush.bf16.msra.mxu0 0
        %1170 = vmatpush.bf16.msra.mxu0 0
        %1171 = vmatpush.bf16.msra.mxu0 %v1069
        %1172 = vmatpush.bf16.msra.mxu0 %v1062
        %1173 = vmatpush.bf16.msra.mxu0 %v1055
        %1174 = vmatpush.bf16.msra.mxu0 %v1048
        %1175 = vmatmul.bf16.gmra.mxu0 %v1100
        %v1176 = vpop.f32.mrf.mxu0
        %v1177 = vadd.f32 %v946, %v1176
        %v1178 = vpop.f32.mrf.mxu0
        %1179 = vdwg.mxu0
        %1180 = vmatpush.bf16.msra.mxu0 0
        %1181 = vmatpush.bf16.msra.mxu0 0
        %1182 = vmatpush.bf16.msra.mxu0 0
        %1183 = vmatpush.bf16.msra.mxu0 0
        %1184 = vmatpush.bf16.msra.mxu0 %v1070
        %1185 = vmatpush.bf16.msra.mxu0 %v1063
        %1186 = vmatpush.bf16.msra.mxu0 %v1056
        %1187 = vmatpush.bf16.msra.mxu0 %v1049
        %1188 = vmatmul.bf16.gmra.mxu0 %v1100
        %v1189 = vpop.f32.mrf.mxu0
        %v1190 = vadd.f32 %v947, %v1189
        %v1191 = vpop.f32.mrf.mxu0
        %1192 = vdwg.mxu0
        %1193 = vst [vmem:[%s271] sm:$0xff] %v1112
        %1194 = vst [vmem:[%s271 + $0x8] sm:$0xff] %v1125
        %1195 = vst [vmem:[%s271 + $0x10] sm:$0xff] %v1138
        %1196 = vst [vmem:[%s271 + $0x18] sm:$0xff] %v1151
        %1197 = vst [vmem:[%s271 + $0x20] sm:$0xff] %v1164
        %1198 = vst [vmem:[%s271 + $0x28] sm:$0xff] %v1177
        %1199 = vst [vmem:[%s271 + $0x30] sm:$0xff] %v1190
        %s1200 = sand.u32 %s181, 1
        %s1201 = scalar_lea.sflag [#allocation3], %s1200
        %s1202 = sand.u32 %s181, 1
        %s1203 = smul.addr %s1202, 56
        %s1204 = scalar_lea.vmem [#allocation2], %s1203
        // Predicated region
        $region49: #{tpu_custom_call.1} parent=47 // pred_check
          %p1205 = pneg %p191
        $region50: #{tpu_custom_call.1} parent=47 // pred_check_branch
          %1207 = sbr.rel (%p1205) target = $region52
        $region51: #{tpu_custom_call.1} parent=47 // pred_region
          %1209 = vsyncadd %s1201, 0
          %s1210 = smul.addr %s21, 7
          %s1211 = smul.addr %s1210, 8
          %s1212 = scalar_lea.hbm %s7, %s1211
          %s1214 = sshll.u32 %s1204, 4
          %s1215 = int_to_ptr.vmem [resolvable:$true] %s1214
          %s1216 = sshll.u32 %s1212, 4
          %s1217 = int_to_ptr.hbm [resolvable:$true] %s1216
          %1219 = dma.vmem_to_hbm [thread:$0]  %s1215, 896, %s1217, %s1201
        $region52: #{tpu_custom_call.1} parent=47 // pred_fallthru
          _
      $region48: #{tpu_custom_call.1} parent=5 // pred_fallthru
        _
      %p1220 = scmp.le.s32.totalorder 2, %s16
      // Predicated region
      $region53: #{tpu_custom_call.1} parent=5 // pred_check
        %p1221 = pneg %p1220
      $region54: #{tpu_custom_call.1} parent=5 // pred_check_branch
        %1223 = sbr.rel (%p1221) target = $region56
      $region55: #{tpu_custom_call.1} parent=5 // pred_region
        %s1224 = ssub.s32 %s16, 2
        // Predicated region
        $region57: #{tpu_custom_call.1} parent=55 // pred_check
          %p1225 = pneg %p197
        $region58: #{tpu_custom_call.1} parent=55 // pred_check_branch
          %1227 = sbr.rel (%p1225) target = $region60
        $region59: #{tpu_custom_call.1} parent=55 // pred_region
          %s1228 = sand.u32 %s182, 1
          %s1229 = scalar_lea.sflag [#allocation3], %s1228
          %s1230 = sand.u32 %s182, 1
          %s1231 = smul.addr %s1230, 56
          %s1232 = scalar_lea.vmem [#allocation2], %s1231
          %1234 = dma.done %s1229, 896
        $region60: #{tpu_custom_call.1} parent=55 // pred_fallthru
          _
      $region56: #{tpu_custom_call.1} parent=5 // pred_fallthru
        _
    $region6: #{tpu_custom_call.1} parent=1 // loop_footer
      %s20 = sadd.s32 1, %s16
    $region7: #{tpu_custom_call.1} parent=1 // loop_footer_branch
      %15 = sbr.rel target = $region3
    $region8: #{tpu_custom_call.1} parent=1 // loop_exit
      _
    %1235 = vsyncpa [#allocation3], 1
    %s1236 = scalar_lea.sflag [#allocation3], 1
    %1237 = vsyncpa %s1236, 1

</llo_original>
